<compile_context>
chip_gen: v7x
topology: tpu7x:2x2x1
jax: 0.10.0
libtpu: 0.0.40
codegen_flags: <defaults>
</compile_context>

<pallas_src>
import functools

import jax
import jax.numpy as jnp
from jax.experimental import pallas as pl
from jax.experimental.pallas import tpu as pltpu

_LANE = 128
_SUBLANE = 8
_TARGET_BLOCK_BYTES = 1 << 20  # ~1 MiB per VMEM buffer (x2 for double buffering)


def _activation_kernel(*refs, n_arrays: int, mode: str, negative_slope: float):
    """Elementwise activation on one (block_rows, cols) VMEM tile per array."""
    in_refs = refs[:n_arrays]
    out_refs = refs[n_arrays:]
    for x_ref, o_ref in zip(in_refs, out_refs):
        x = x_ref[...]
        if mode == "relu":
            y = jnp.maximum(x, jnp.zeros((), x.dtype))
        elif mode == "leaky_relu":
            y = jnp.where(x >= 0, x, x * jnp.asarray(negative_slope, x.dtype))
        else:  # 'none' (never reached: wrapper short-circuits)
            y = x
        o_ref[...] = y


def _apply_activation_multi(arrays, mode: str, negative_slope: float,
                            target_block_bytes: int = _TARGET_BLOCK_BYTES):
    """Apply the activation to one or more same-shape/dtype real arrays with a
    single pallas_call. Returns a tuple of arrays (same order as inputs)."""
    if mode == "none":
        return tuple(arrays)

    x0 = arrays[0]
    orig_shape = x0.shape
    dtype = x0.dtype
    total = x0.size
    if total == 0:
        return tuple(arrays)

    # ---- choose a lane-dense 2D layout -------------------------------------
    pad = (-total) % _LANE            # pad only to the next multiple of 128
    padded_total = total + pad

    cols = _LANE
    for c in (1024, 512, 256):        # widest lane-dense width that divides
        if padded_total % c == 0:
            cols = c
            break
    rows = padded_total // cols

    itemsize = jnp.dtype(dtype).itemsize
    # rows per packed vreg tile: 8 for 32-bit, 16 for 16-bit, 32 for 8-bit
    pack = _SUBLANE * max(1, 4 // itemsize)

    target_rows = max(pack, target_block_bytes // (cols * itemsize))
    if rows <= target_rows:
        block_rows = rows             # single block == full array (always legal)
    else:
        block_rows = (target_rows // pack) * pack
    grid = (pl.cdiv(rows, block_rows),)

    # ---- reshape inputs to (rows, cols) ------------------------------------
    def to_2d(a):
        flat = jnp.ravel(a)
        if pad:
            flat = jnp.pad(flat, (0, pad))
        return flat.reshape(rows, cols)

    inputs_2d = [to_2d(a) for a in arrays]

    n = len(arrays)
    kernel = functools.partial(
        _activation_kernel, n_arrays=n, mode=mode, negative_slope=negative_slope
    )
    block_spec = pl.BlockSpec((block_rows, cols), lambda i: (i, 0))

    outs = pl.pallas_call(
        kernel,
        out_shape=tuple(
            jax.ShapeDtypeStruct((rows, cols), dtype) for _ in range(n)
        ),
        grid_spec=pltpu.PrefetchScalarGridSpec(
            num_scalar_prefetch=0,
            grid=grid,
            in_specs=[block_spec] * n,
            out_specs=tuple(block_spec for _ in range(n)),
        ),
        compiler_params=pltpu.CompilerParams(
            dimension_semantics=("parallel",)
        ),
    )(*inputs_2d)

    if not isinstance(outs, (list, tuple)):
        outs = (outs,)

    def from_2d(o):
        flat = o.reshape(-1)
        if pad:
            flat = flat[:total]
        return flat.reshape(orig_shape)

    return tuple(from_2d(o) for o in outs)


class Activation:
    """JAX/Pallas port of the PyTorch Activation module."""

    def __init__(self, type: str):
        if type not in ("none", "relu", "leaky_relu"):
            raise ValueError("Invalid activation type: %s" % type)
        self.type = type
        self.negative_slope = 0.01  # nn.LeakyReLU default

    def __call__(self, x):
        if self.type == "none":
            return x  # identity: no kernel launch, no HBM traffic
        if jnp.iscomplexobj(x):
            # Fused single launch: real and imag as two in/out refs.
            real, imag = _apply_activation_multi(
                (jnp.real(x), jnp.imag(x)), self.type, self.negative_slope
            )
            return jax.lax.complex(real, imag)
        return _apply_activation_multi((x,), self.type, self.negative_slope)[0]


def _reference_real(x, mode, negative_slope=0.01):
    if mode == "relu":
        return jnp.maximum(x, 0)
    if mode == "leaky_relu":
        return jnp.where(x >= 0, x, x * negative_slope)
    return x


if __name__ == "__main__":
    key = jax.random.PRNGKey(0)
    k1, k2, k3, k4 = jax.random.split(key, 4)

    # NCHW real input (batch=2, channels=4, spatial=16x16)
    x_real = jax.random.normal(k1, (2, 4, 16, 16), dtype=jnp.float32)
    # Complex input of the same shape
    x_cplx = jax.lax.complex(
        jax.random.normal(k2, (2, 4, 16, 16), dtype=jnp.float32),
        jax.random.normal(k3, (2, 4, 16, 16), dtype=jnp.float32),
    )

    ok = True
    for mode in ("none", "relu", "leaky_relu"):
        act = Activation(mode)

        y = jax.block_until_ready(act(x_real))
        y_ref = _reference_real(x_real, mode)
        ok &= bool(jnp.allclose(y, y_ref, atol=1e-6))

        yc = jax.block_until_ready(act(x_cplx))
        yc_ref = jax.lax.complex(
            _reference_real(jnp.real(x_cplx), mode),
            _reference_real(jnp.imag(x_cplx), mode),
        )
        ok &= bool(jnp.allclose(yc, yc_ref, atol=1e-6))

    # bf16 input (exercises the 16-row sublane-packing path)
    x_bf16 = jax.random.normal(k4, (2, 4, 16, 16), dtype=jnp.bfloat16)
    y_bf16 = jax.block_until_ready(Activation("relu")(x_bf16))
    ok &= bool(jnp.allclose(y_bf16, jnp.maximum(x_bf16, 0)))

    # Non-tile-aligned shape (exercises the minimal-pad + trailing-slice path)
    x_odd = jax.random.normal(k1, (3, 5, 7, 11), dtype=jnp.float32)
    y_odd = jax.block_until_ready(Activation("leaky_relu")(x_odd))
    ok &= bool(jnp.allclose(y_odd, _reference_real(x_odd, "leaky_relu"), atol=1e-6))

    # Force a multi-block grid with a ragged final block (small target block)
    y_multi = jax.block_until_ready(
        _apply_activation_multi((x_odd,), "relu", 0.01, target_block_bytes=4096)[0]
    )
    ok &= bool(jnp.allclose(y_multi, _reference_real(x_odd, "relu"), atol=1e-6))

    if ok:
        print("KERNEL_OK")
    else:
        print("KERNEL_MISMATCH")
</pallas_src>

<mosaic_0001>
module attributes {stable_mosaic.version = 11 : i64} {
  func.func @_activation_kernel(%arg0: i32, %arg1: memref<2x1024xf32, #tpu.memory_space<vmem>>, %arg2: memref<2x1024xf32, #tpu.memory_space<vmem>>) attributes {dimension_semantics = [#tpu.dimension_semantics<parallel>], iteration_bounds = array<i64: 1>, scalar_prefetch = 0 : i64, scratch_operands = 0 : i64, tpu.core_type = #tpu.core_type<tc>, window_params = [{transform_indices = @transform_0, window_bounds = array<i64: 2, 1024>}, {transform_indices = @transform_1, window_bounds = array<i64: 2, 1024>}]} {
    %c0 = arith.constant 0 : index
    %c0_0 = arith.constant 0 : index
    %0 = vector.load %arg1[%c0, %c0_0] : memref<2x1024xf32, #tpu.memory_space<vmem>>, vector<2x1024xf32>
    %cst = arith.constant 0.000000e+00 : f32
    %1 = vector.broadcast %cst : f32 to vector<2x1024xf32>
    %2 = arith.maximumf %0, %1 : vector<2x1024xf32>
    %c0_1 = arith.constant 0 : index
    %c0_2 = arith.constant 0 : index
    %3 = vector.load %arg2[%c0_1, %c0_2] : memref<2x1024xf32, #tpu.memory_space<vmem>>, vector<2x1024xf32>
    tpu.vector_store %arg2[%c0_1, %c0_2], %2 {strides = array<i32>} : memref<2x1024xf32, #tpu.memory_space<vmem>>, vector<2x1024xf32>,
    return
  }
  func.func @transform_0(%arg0: i32) -> (i32, i32) {
    %c0_i32 = arith.constant 0 : i32
    %c0_i32_0 = arith.constant 0 : i32
    return %arg0, %c0_i32 : i32, i32
  }
  func.func @transform_1(%arg0: i32) -> (i32, i32) {
    %c0_i32 = arith.constant 0 : i32
    %c0_i32_0 = arith.constant 0 : i32
    return %arg0, %c0_i32 : i32, i32
  }
}

</mosaic_0001>

<llo_original>
// kernel: tpu_custom_call.1
$region0: #{tpu_custom_call.1}
  #allocation0 [shape = 'u32[]', space=smem, size = 0x4, offset = 0x4, fixed_abs, tag = 'smem constant byte address 0x4 - core index']
  #allocation1 [shape = 'u32[144,128]{1,0:T(1,128)}', space=vmem, size = 0x12000, scoped, tag = 'internal scratch']
  %s0 = inlined_call_operand.hbm [shape: f32[2,1024], index: 0, kind: input, shape index: {}]
  %s1 = inlined_call_operand.hbm [shape: f32[2,1024], index: 1, kind: output, shape index: {}]
  %s2 = sld [smem:[#allocation0]]
  $region18: #{tpu_custom_call.1} parent=0
    _
  %s4 = ssub.s32 1, %s2
  %s5 = scalar_select 0, %s4, %s2
  $region1: #{tpu_custom_call.1} parent=0
    #allocation2 [shape = 'u8[8192]{0}', space=vmem, size = 0x2000, scoped, tag = 'input window, operand 0, single buffered']
    #allocation3 [shape = 's32[1]{0}', space=sflag, size = 0x4, scoped, tag = 'scoped memory for tpu_custom_call.1']
    #allocation4 [shape = 's32[1]{0}', space=sflag, size = 0x4, scoped, tag = 'scoped memory for tpu_custom_call.1']
    #allocation5 [shape = 'u8[8192]{0}', space=vmem, size = 0x2000, scoped, tag = 'output window, operand 0, single buffered']
    %6 = vsyncpa [#allocation3], 0
    %7 = vsyncpa [#allocation4], 0
    // Predicated region
    $region2: #{tpu_custom_call.1} parent=1 // pred_check
      _
    $region3: #{tpu_custom_call.1} parent=1 // pred_check_branch
      %9 = sbr.rel (0) target = $region5
    $region4: #{tpu_custom_call.1} parent=1 // pred_region
      %s11 = ssub.s32 256, 256
      %12 = vsyncadd [#allocation3], %s11
      %s14 = sshll.u32 [#allocation2], 4
      %s15 = int_to_ptr.vmem [resolvable:$true] %s14
      %17 = dma.hbm_to_vmem [thread:$0]  %s0, 256, %s15, [#allocation3]
    $region5: #{tpu_custom_call.1} parent=1 // pred_fallthru
      _
    // Predicated region
    $region6: #{tpu_custom_call.1} parent=1 // pred_check
      _
    $region7: #{tpu_custom_call.1} parent=1 // pred_check_branch
      %19 = sbr.rel (0) target = $region9
    $region8: #{tpu_custom_call.1} parent=1 // pred_region
      %20 = dma.done [#allocation3], 256
    $region9: #{tpu_custom_call.1} parent=1 // pred_fallthru
      _
    %v21 = vld [vmem:[#allocation2] sm:$0xff]
    %v22 = vld [vmem:[#allocation2 + $0x8] sm:$0xff]
    %v23 = vmax.f32 %v21, 0.0
    %v24 = vmax.f32 %v22, 0.0
    %25 = vst [vmem:[#allocation5] sm:$0xff] %v23
    %26 = vst [vmem:[#allocation5 + $0x8] sm:$0xff] %v24
    // Predicated region
    $region10: #{tpu_custom_call.1} parent=1 // pred_check
      _
    $region11: #{tpu_custom_call.1} parent=1 // pred_check_branch
      %28 = sbr.rel (0) target = $region13
    $region12: #{tpu_custom_call.1} parent=1 // pred_region
      %s30 = ssub.s32 256, 256
      %31 = vsyncadd [#allocation4], %s30
      %s33 = sshll.u32 [#allocation5], 4
      %s34 = int_to_ptr.vmem [resolvable:$true] %s33
      %36 = dma.vmem_to_hbm [thread:$0]  %s34, 256, %s1, [#allocation4]
    $region13: #{tpu_custom_call.1} parent=1 // pred_fallthru
      _
    // Predicated region
    $region14: #{tpu_custom_call.1} parent=1 // pred_check
      _
    $region15: #{tpu_custom_call.1} parent=1 // pred_check_branch
      %38 = sbr.rel (0) target = $region17
    $region16: #{tpu_custom_call.1} parent=1 // pred_region
      %39 = dma.done [#allocation4], 256
    $region17: #{tpu_custom_call.1} parent=1 // pred_fallthru
      _
    %40 = vsyncpa [#allocation3], 1
    %41 = vsyncpa [#allocation4], 1

</llo_original>
